<compile_context>
chip_gen: v6e
topology: v6e:2x2x1
jax: 0.10.0
libtpu: 0.0.40
codegen_flags: <defaults>
</compile_context>

<pallas_src>
import math

import jax
import jax.numpy as jnp
from jax.experimental import pallas as pl
from jax.experimental.pallas import tpu as pltpu


def _round_up(x, m):
    return (x + m - 1) // m * m


def _make_disc_kernel(mxu_dtype):
    def kernel(c_ref, hpl_ref, hmi_ref, wt_ref, bias_ref, out_ref):
        # c_ref, hpl_ref, hmi_ref : (tb, Kp) activations (f32 or bf16)
        # wt_ref                  : (Kp, Kp) bf16 = W^T (zero padded if needed)
        # bias_ref                : (1,)     f32 scalar bias in SMEM
        # out_ref                 : (tb, 2)  f32 ; [:,0]=sc_1, [:,1]=sc_2
        #
        # u[b, i] = sum_j c[b, j] * W[i, j].  W was transposed on the host, so
        # this is a plain (tb,Kp)x(Kp,Kp) MXU contraction with f32 accumulation
        # and no in-kernel transpose on the MXU feed path.  The bf16 cast is
        # done here (VPU, hidden under DMA) so the wrapper never materializes a
        # casted copy of the activations in HBM.
        u = jnp.dot(c_ref[...].astype(mxu_dtype), wt_ref[...],
                    preferred_element_type=jnp.float32)        # (tb, Kp) f32
        b = bias_ref[0]
        hpl = hpl_ref[...].astype(jnp.float32)
        hmi = hmi_ref[...].astype(jnp.float32)
        out_ref[:, 0:1] = jnp.sum(hpl * u, axis=-1, keepdims=True) + b
        out_ref[:, 1:2] = jnp.sum(hmi * u, axis=-1, keepdims=True) + b
    return kernel


def discriminator_forward(c, h_pl, h_mi, w, bias, s_bias1=None, s_bias2=None,
                          *, block_b=512, mxu_dtype=jnp.bfloat16):
    """Forward of the Discriminator for 2-D inputs (B, n_h).

    w:    (n_h, n_h)  Bilinear weight with the size-1 output dim squeezed.
    bias: (1,)        Bilinear bias.
    Precision contract: the MXU is fed in bf16 with f32 accumulation.
    Returns (logits, logits[:len(logits)//2]).
    """
    B, K = h_pl.shape
    assert c.shape == (B, K) and h_mi.shape == (B, K) and w.shape == (K, K)

    Kp = _round_up(K, 128)
    k_padded = Kp != K

    # ---- batch tiling: big tiles, but keep >=~4 grid steps for v7x megacore.
    tb = _round_up(min(block_b, B), 16)
    tb = min(tb, max(128, _round_up(pl.cdiv(B, 4), 16)))
    tb = max(tb, 16)
    grid_b = pl.cdiv(B, tb)          # ragged last block; no batch padding

    # ---- host-side prep (only the tiny weight/bias are touched when K is
    # lane aligned; activations go to the kernel untouched).
    if k_padded:
        # Lane dim must be zero padded so the matmul / lane reductions never
        # see stale garbage; fold the bf16 cast into this single pad op.
        def pad_k(x):
            return jnp.pad(x, ((0, 0), (0, Kp - K))).astype(mxu_dtype)
        c_in, hpl_in, hmi_in = pad_k(c), pad_k(h_pl), pad_k(h_mi)
        w_t = jnp.pad(w.T, ((0, Kp - K), (0, Kp - K))).astype(mxu_dtype)
    else:
        c_in, hpl_in, hmi_in = c, h_pl, h_mi
        w_t = w.T.astype(mxu_dtype)
    bias_sc = jnp.reshape(bias, (1,)).astype(jnp.float32)

    # ---- weight buffering / VMEM budget.
    w_item = jnp.dtype(mxu_dtype).itemsize
    single_buffer_w = 2 * Kp * Kp * w_item > (8 << 20)   # only matters for big n_h
    w_spec_kwargs = dict(pipeline_mode=pl.Buffered(1)) if single_buffer_w else {}
    w_spec = pl.BlockSpec((Kp, Kp), lambda i: (0, 0), **w_spec_kwargs)

    act_bytes = 2 * tb * Kp * (c_in.dtype.itemsize + hpl_in.dtype.itemsize
                               + hmi_in.dtype.itemsize)
    w_bytes = (1 if single_buffer_w else 2) * Kp * Kp * w_item
    out_bytes = 2 * tb * 2 * 4
    vmem_limit = max(32 << 20,
                     min(int(1.5 * (act_bytes + w_bytes + out_bytes)) + (4 << 20),
                         64 << 20))
    # TODO(synk): for very large n_h (weight approaching v7x's 64 MiB VMEM) add
    # a K-tiled fallback: second "arbitrary" grid axis over W's output rows with
    # f32 score accumulators in VMEM scratch (pl.when init/finalize).

    act_spec = pl.BlockSpec((tb, Kp), lambda i: (i, 0))

    scores = pl.pallas_call(
        _make_disc_kernel(mxu_dtype),
        out_shape=jax.ShapeDtypeStruct((B, 2), jnp.float32),
        grid_spec=pl.GridSpec(
            grid=(grid_b,),
            in_specs=[
                act_spec,                                           # c
                act_spec,                                           # h_pl
                act_spec,                                           # h_mi
                w_spec,                                             # W^T, VMEM-resident
                pl.BlockSpec(memory_space=pltpu.MemorySpace.SMEM),  # bias
            ],
            out_specs=pl.BlockSpec((tb, 2), lambda i: (i, 0)),      # merged scores
        ),
        compiler_params=pltpu.CompilerParams(
            dimension_semantics=("parallel",),          # megacore on v7x
            vmem_limit_bytes=vmem_limit),
    )(c_in, hpl_in, hmi_in, w_t, bias_sc)

    sc1 = scores[:, 0]
    sc2 = scores[:, 1]
    # Optional additive score biases from the module signature (tiny adds).
    if s_bias1 is not None:
        sc1 = sc1 + jnp.reshape(s_bias1, (-1,))
    if s_bias2 is not None:
        sc2 = sc2 + jnp.reshape(s_bias2, (-1,))

    logits = jnp.concatenate([sc1, sc2], axis=0)   # == cat(...,0).squeeze(-1)
    v = logits.shape[0]
    return logits, logits[:v // 2]


def init_bilinear_params(key, n_h):
    # nn.Bilinear(n_h, n_h, 1).weight has shape (1, n_h, n_h); xavier_uniform_
    # uses fan_in = n_h * n_h, fan_out = 1 * n_h for a 3-D tensor.  Bias -> 0.
    fan_in = n_h * n_h
    fan_out = 1 * n_h
    limit = math.sqrt(6.0 / (fan_in + fan_out))
    w = jax.random.uniform(key, (n_h, n_h), dtype=jnp.float32,
                           minval=-limit, maxval=limit)   # out-dim squeezed
    bias = jnp.zeros((1,), dtype=jnp.float32)
    return w, bias


def _matched_reference(c, h_pl, h_mi, w, bias, mxu_dtype=jnp.bfloat16):
    # Mirrors the kernel numerics: bf16 MXU inputs, f32 accumulation; h stays
    # f32 when K is lane aligned, otherwise it went through the padded bf16 copy.
    K = w.shape[0]
    if K % 128 != 0:
        hpl = h_pl.astype(mxu_dtype).astype(jnp.float32)
        hmi = h_mi.astype(mxu_dtype).astype(jnp.float32)
    else:
        hpl = h_pl.astype(jnp.float32)
        hmi = h_mi.astype(jnp.float32)
    u = jax.lax.dot_general(c.astype(mxu_dtype), w.astype(mxu_dtype),
                            (((1,), (1,)), ((), ())),
                            preferred_element_type=jnp.float32)
    sc1 = jnp.sum(hpl * u, axis=-1) + bias[0]
    sc2 = jnp.sum(hmi * u, axis=-1) + bias[0]
    return jnp.concatenate([sc1, sc2], axis=0)


def _f32_reference(c, h_pl, h_mi, w, bias):
    u = jnp.einsum("bj,ij->bi", c, w, precision=jax.lax.Precision.HIGHEST)
    sc1 = jnp.sum(h_pl * u, axis=-1) + bias[0]
    sc2 = jnp.sum(h_mi * u, axis=-1) + bias[0]
    return jnp.concatenate([sc1, sc2], axis=0)


if __name__ == "__main__":
    key = jax.random.PRNGKey(0)

    # Two small DGI-like configs:
    #  * (200, 96):  K not lane aligned -> exercises the K-pad path and the
    #                ragged last batch block (200 = 3*64 + 8).
    #  * (200, 128): K lane aligned -> exercises the zero-copy path (activations
    #                fed untouched, bf16 cast in-kernel) + ragged batch block.
    for n_nodes, n_h, block_b in [(200, 96, 64), (200, 128, 64)]:
        k_c, k_pl, k_mi, k_w = jax.random.split(jax.random.fold_in(key, n_h), 4)
        c = jax.random.normal(k_c, (n_nodes, n_h), dtype=jnp.float32)
        h_pl = jax.random.normal(k_pl, (n_nodes, n_h), dtype=jnp.float32)
        h_mi = jax.random.normal(k_mi, (n_nodes, n_h), dtype=jnp.float32)
        w, bias = init_bilinear_params(k_w, n_h)

        logits, half = discriminator_forward(c, h_pl, h_mi, w, bias,
                                             block_b=block_b)
        logits = jax.block_until_ready(logits)
        half = jax.block_until_ready(half)

        assert logits.shape == (2 * n_nodes,)
        assert half.shape == (n_nodes,)

        # (1) Matched-precision reference -> tight tolerance (checks the kernel).
        logits_m = _matched_reference(c, h_pl, h_mi, w, bias)
        assert jnp.allclose(logits, logits_m, atol=5e-3, rtol=5e-3), \
            f"kernel mismatch vs matched-precision reference (n_h={n_h})"

        # (2) Full-f32 module reference (PyTorch semantics) -> loose tolerance
        #     because the kernel feeds the MXU in bf16.
        logits_f = _f32_reference(c, h_pl, h_mi, w, bias)
        assert jnp.allclose(logits, logits_f, atol=0.3, rtol=3e-2), \
            f"mismatch vs f32 module reference (n_h={n_h})"

        assert jnp.allclose(half, logits[:n_nodes]), "half-slice mismatch"

    print("KERNEL_OK")
</pallas_src>

<mosaic_0001>
module attributes {stable_mosaic.version = 11 : i64} {
  func.func @kernel(%arg0: i32, %arg1: memref<64x128xbf16, #tpu.memory_space<vmem>>, %arg2: memref<64x128xbf16, #tpu.memory_space<vmem>>, %arg3: memref<64x128xbf16, #tpu.memory_space<vmem>>, %arg4: memref<128x128xbf16, #tpu.memory_space<vmem>>, %arg5: memref<1xf32, #tpu.memory_space<smem>>, %arg6: memref<64x2xf32, #tpu.memory_space<vmem>>) attributes {dimension_semantics = [#tpu.dimension_semantics<parallel>], iteration_bounds = array<i64: 4>, scalar_prefetch = 0 : i64, scratch_operands = 0 : i64, tpu.core_type = #tpu.core_type<tc>, window_params = [{transform_indices = @transform_0, window_bounds = array<i64: 64, 128>}, {transform_indices = @transform_1, window_bounds = array<i64: 64, 128>}, {transform_indices = @transform_2, window_bounds = array<i64: 64, 128>}, {pipeline_mode = #tpu.pipeline_mode<synchronous>, transform_indices = @transform_3, window_bounds = array<i64: 128, 128>}, {transform_indices = @transform_4, window_bounds = array<i64: 1>}, {transform_indices = @transform_5, window_bounds = array<i64: 64, 2>}]} {
    %c0 = arith.constant 0 : index
    %c0_0 = arith.constant 0 : index
    %0 = vector.load %arg1[%c0, %c0_0] : memref<64x128xbf16, #tpu.memory_space<vmem>>, vector<64x128xbf16>
    %c0_1 = arith.constant 0 : index
    %c0_2 = arith.constant 0 : index
    %1 = vector.load %arg4[%c0_1, %c0_2] : memref<128x128xbf16, #tpu.memory_space<vmem>>, vector<128x128xbf16>
    %cst = arith.constant dense<0.000000e+00> : vector<64x128xf32>
    %2 = tpu.matmul %0, %1, %cst {dimension_numbers = #tpu.dot_dimension_numbers<[1], [0], [0], [1], [0, 0, 1, 1], [], []>} : vector<64x128xbf16>, vector<128x128xbf16>, vector<64x128xf32> -> vector<64x128xf32>
    %c0_3 = arith.constant 0 : index
    %3 = memref.load %arg5[%c0_3] : memref<1xf32, #tpu.memory_space<smem>>
    %c0_4 = arith.constant 0 : index
    %c0_5 = arith.constant 0 : index
    %4 = vector.load %arg2[%c0_4, %c0_5] : memref<64x128xbf16, #tpu.memory_space<vmem>>, vector<64x128xbf16>
    %5 = arith.extf %4 : vector<64x128xbf16> to vector<64x128xf32>
    %c0_6 = arith.constant 0 : index
    %c0_7 = arith.constant 0 : index
    %6 = vector.load %arg3[%c0_6, %c0_7] : memref<64x128xbf16, #tpu.memory_space<vmem>>, vector<64x128xbf16>
    %7 = arith.extf %6 : vector<64x128xbf16> to vector<64x128xf32>
    %8 = arith.mulf %5, %2 : vector<64x128xf32>
    %cst_8 = arith.constant dense<0.000000e+00> : vector<64xf32>
    %9 = vector.multi_reduction <add>, %8, %cst_8 [1] : vector<64x128xf32> to vector<64xf32>
    %10 = vector.shape_cast %9 : vector<64xf32> to vector<64x1xf32>
    %11 = vector.broadcast %3 : f32 to vector<64x1xf32>
    %12 = arith.addf %10, %11 : vector<64x1xf32>
    %c0_9 = arith.constant 0 : index
    %c0_10 = arith.constant 0 : index
    %13 = vector.load %arg6[%c0_9, %c0_10] : memref<64x2xf32, #tpu.memory_space<vmem>>, vector<64x1xf32>
    tpu.vector_store %arg6[%c0_9, %c0_10], %12 {strides = array<i32>} : memref<64x2xf32, #tpu.memory_space<vmem>>, vector<64x1xf32>,
    %14 = arith.mulf %7, %2 : vector<64x128xf32>
    %cst_11 = arith.constant dense<0.000000e+00> : vector<64xf32>
    %15 = vector.multi_reduction <add>, %14, %cst_11 [1] : vector<64x128xf32> to vector<64xf32>
    %16 = vector.shape_cast %15 : vector<64xf32> to vector<64x1xf32>
    %17 = vector.broadcast %3 : f32 to vector<64x1xf32>
    %18 = arith.addf %16, %17 : vector<64x1xf32>
    %c0_12 = arith.constant 0 : index
    %c1 = arith.constant 1 : index
    %19 = vector.load %arg6[%c0_12, %c1] : memref<64x2xf32, #tpu.memory_space<vmem>>, vector<64x1xf32>
    tpu.vector_store %arg6[%c0_12, %c1], %18 {strides = array<i32>} : memref<64x2xf32, #tpu.memory_space<vmem>>, vector<64x1xf32>,
    return
  }
  func.func @transform_0(%arg0: i32) -> (i32, i32) {
    %c0_i32 = arith.constant 0 : i32
    %c0_i32_0 = arith.constant 0 : i32
    return %arg0, %c0_i32 : i32, i32
  }
  func.func @transform_1(%arg0: i32) -> (i32, i32) {
    %c0_i32 = arith.constant 0 : i32
    %c0_i32_0 = arith.constant 0 : i32
    return %arg0, %c0_i32 : i32, i32
  }
  func.func @transform_2(%arg0: i32) -> (i32, i32) {
    %c0_i32 = arith.constant 0 : i32
    %c0_i32_0 = arith.constant 0 : i32
    return %arg0, %c0_i32 : i32, i32
  }
  func.func @transform_3(%arg0: i32) -> (i32, i32) {
    %c0_i32 = arith.constant 0 : i32
    %c0_i32_0 = arith.constant 0 : i32
    %c0_i32_1 = arith.constant 0 : i32
    return %c0_i32, %c0_i32_0 : i32, i32
  }
  func.func @transform_4(%arg0: i32) -> i32 {
    %c0_i32 = arith.constant 0 : i32
    %c0_i32_0 = arith.constant 0 : i32
    return %c0_i32 : i32
  }
  func.func @transform_5(%arg0: i32) -> (i32, i32) {
    %c0_i32 = arith.constant 0 : i32
    %c0_i32_0 = arith.constant 0 : i32
    return %arg0, %c0_i32 : i32, i32
  }
}

</mosaic_0001>

<llo_original>
// kernel: tpu_custom_call.1
$region0: #{tpu_custom_call.1}
  #allocation0 [shape = 'u32[]', space=smem, size = 0x4, offset = 0x4, fixed_abs, tag = 'smem constant byte address 0x4 - core index']
  #allocation1 [shape = 'u32[144,128]{1,0:T(1,128)}', space=vmem, size = 0x12000, scoped, tag = 'internal scratch']
  #allocation2 [shape = 'f32[1]{0:T(128)S(6)}', space=smem, size = 0x200, scoped, tag = 'scoped memory for tpu_custom_call.1']
  %s0 = inlined_call_operand.hbm [shape: bf16[200,128], index: 0, kind: input, shape index: {}]
  %s1 = inlined_call_operand.hbm [shape: bf16[200,128], index: 1, kind: input, shape index: {}]
  %s2 = inlined_call_operand.hbm [shape: bf16[200,128], index: 2, kind: input, shape index: {}]
  %s3 = inlined_call_operand.hbm [shape: bf16[128,128], index: 3, kind: input, shape index: {}]
  %s4 = inlined_call_operand.<no memory space> [shape: f32[1], index: 4, kind: input, shape index: {}]
  %s5 = inlined_call_operand.vmem [shape: f32[200,2], index: 5, kind: output, shape index: {}]
  %s6 = sld [smem:[#allocation0]]
  $region117: #{tpu_custom_call.1} parent=0
    _
  %s8 = ssub.s32 1, %s6
  %s9 = scalar_select 0, %s8, %s6
  %10 = sst [smem:[#allocation2]] %s4
  $region1: #{tpu_custom_call.1} parent=0
    #allocation3 [shape = 'u8[32768]{0}', space=vmem, size = 0x8000, scoped, tag = 'input window, operand 0']
    #allocation4 [shape = 's32[2]{0}', space=sflag, size = 0x8, scoped, tag = 'scoped memory for tpu_custom_call.1']
    #allocation5 [shape = 'u8[32768]{0}', space=vmem, size = 0x8000, scoped, tag = 'input window, operand 1']
    #allocation6 [shape = 's32[2]{0}', space=sflag, size = 0x8, scoped, tag = 'scoped memory for tpu_custom_call.1']
    #allocation7 [shape = 'u8[32768]{0}', space=vmem, size = 0x8000, scoped, tag = 'input window, operand 2']
    #allocation8 [shape = 'u8[32768]{0}', space=vmem, size = 0x8000, scoped, tag = 'input window, operand 3, single buffered']
    #allocation9 [shape = 's32[1]{0}', space=sflag, size = 0x4, scoped, tag = 'scoped memory for tpu_custom_call.1']
    #allocation10 [shape = 'u8[65536]{0}', space=vmem, size = 0x10000, scoped, tag = 'output window, operand 0']
    %11 = vsyncpa [#allocation4], 0
    %s12 = scalar_lea.sflag [#allocation4], 1
    %13 = vsyncpa %s12, 0
    %14 = vsyncpa [#allocation6], 0
    %s15 = scalar_lea.sflag [#allocation6], 1
    %16 = vsyncpa %s15, 0
    %17 = vsyncpa [#allocation9], 0
    loop: start=0, step=1, limit=6
    $region2: #{tpu_custom_call.1} parent=1 // loop_pre_header
      _
    $region3: #{tpu_custom_call.1} parent=1 // loop_header
      %s19 = sphi 0, %s23
      %p20 = scmp.ge.s32.totalorder %s19, 6
      %s29 = sphi 0, %s31
      %s32 = sphi 0, %s29
      %s33 = sphi 0, %s32
      %s49 = sphi 0, %s33
      %s55 = sphi 0, %s57
      %s58 = sphi 0, %s55
      %s59 = sphi 0, %s58
      %s75 = sphi 0, %s59
      %s81 = sphi 0, %s83
      %s84 = sphi 0, %s81
      %s85 = sphi 0, %s84
      %s101 = sphi 0, %s85
      %s105 = sphi 0, %s105
      %s107 = sphi 0, %s105
      %s108 = sphi 0, %s107
      %s122 = sphi 0, %s108
      %s126 = sphi 0, %s126
      %s128 = sphi 0, %s126
      %s129 = sphi 0, %s128
      %s143 = sphi 0, %s129
      %s149 = sphi 0, %s151
      %s152 = sphi 0, %s149
      %s153 = sphi 0, %s152
      %s169 = sphi 0, %s153
    $region4: #{tpu_custom_call.1} parent=1 // loop_header_branch
      %22 = sbr.rel (%p20) target = $region8
    $region5: #{tpu_custom_call.1} parent=1 // loop_body
      %s24 = ssub.s32 %s19, 1
      %s25 = ssub.s32 %s19, 2
      %s26 = sadd.s32 %s19, 1
      %s27 = ssub.s32 %s19, %s26
      %p28 = scmp.eq.s32.totalorder %s27, 0
      %s30 = sadd.s32 %s29, 1
      %s31 = scalar_select %p28, %s29, %s30
      %p34 = pneg %p28
      %p35 = scmp.eq.s32.totalorder %s19, 3
      %p36 = por %p34, %p35
      %p37 = scmp.ne.s32.totalorder %s29, %s32
      %p38 = scmp.eq.s32.totalorder %s19, 0
      %p39 = por %p37, %p38
      %p40 = scmp.ne.s32.totalorder %s29, %s32
      %p41 = scmp.eq.s32.totalorder %s24, 3
      %p42 = por %p40, %p41
      %p43 = scmp.ne.s32.totalorder %s32, %s33
      %p44 = scmp.eq.s32.totalorder %s24, 0
      %p45 = por %p43, %p44
      %p46 = scmp.ne.s32.totalorder %s32, %s33
      %p47 = scmp.eq.s32.totalorder %s25, 3
      %p48 = por %p46, %p47
      %p50 = scmp.ne.s32.totalorder %s33, %s49
      %p51 = scmp.eq.s32.totalorder %s25, 0
      %p52 = por %p50, %p51
      %s53 = ssub.s32 %s19, %s26
      %p54 = scmp.eq.s32.totalorder %s53, 0
      %s56 = sadd.s32 %s55, 1
      %s57 = scalar_select %p54, %s55, %s56
      %p60 = pneg %p54
      %p61 = scmp.eq.s32.totalorder %s19, 3
      %p62 = por %p60, %p61
      %p63 = scmp.ne.s32.totalorder %s55, %s58
      %p64 = scmp.eq.s32.totalorder %s19, 0
      %p65 = por %p63, %p64
      %p66 = scmp.ne.s32.totalorder %s55, %s58
      %p67 = scmp.eq.s32.totalorder %s24, 3
      %p68 = por %p66, %p67
      %p69 = scmp.ne.s32.totalorder %s58, %s59
      %p70 = scmp.eq.s32.totalorder %s24, 0
      %p71 = por %p69, %p70
      %p72 = scmp.ne.s32.totalorder %s58, %s59
      %p73 = scmp.eq.s32.totalorder %s25, 3
      %p74 = por %p72, %p73
      %p76 = scmp.ne.s32.totalorder %s59, %s75
      %p77 = scmp.eq.s32.totalorder %s25, 0
      %p78 = por %p76, %p77
      %s79 = ssub.s32 %s19, %s26
      %p80 = scmp.eq.s32.totalorder %s79, 0
      %s82 = sadd.s32 %s81, 1
      %s83 = scalar_select %p80, %s81, %s82
      %p86 = pneg %p80
      %p87 = scmp.eq.s32.totalorder %s19, 3
      %p88 = por %p86, %p87
      %p89 = scmp.ne.s32.totalorder %s81, %s84
      %p90 = scmp.eq.s32.totalorder %s19, 0
      %p91 = por %p89, %p90
      %p92 = scmp.ne.s32.totalorder %s81, %s84
      %p93 = scmp.eq.s32.totalorder %s24, 3
      %p94 = por %p92, %p93
      %p95 = scmp.ne.s32.totalorder %s84, %s85
      %p96 = scmp.eq.s32.totalorder %s24, 0
      %p97 = por %p95, %p96
      %p98 = scmp.ne.s32.totalorder %s84, %s85
      %p99 = scmp.eq.s32.totalorder %s25, 3
      %p100 = por %p98, %p99
      %p102 = scmp.ne.s32.totalorder %s85, %s101
      %p103 = scmp.eq.s32.totalorder %s25, 0
      %p104 = por %p102, %p103
      %s106 = sadd.s32 %s105, 1
      %p109 = scmp.eq.s32.totalorder %s19, 3
      %p110 = scmp.ne.s32.totalorder %s105, %s107
      %p111 = scmp.eq.s32.totalorder %s19, 0
      %p112 = por %p110, %p111
      %p113 = scmp.ne.s32.totalorder %s105, %s107
      %p114 = scmp.eq.s32.totalorder %s24, 3
      %p115 = por %p113, %p114
      %p116 = scmp.ne.s32.totalorder %s107, %s108
      %p117 = scmp.eq.s32.totalorder %s24, 0
      %p118 = por %p116, %p117
      %p119 = scmp.ne.s32.totalorder %s107, %s108
      %p120 = scmp.eq.s32.totalorder %s25, 3
      %p121 = por %p119, %p120
      %p123 = scmp.ne.s32.totalorder %s108, %s122
      %p124 = scmp.eq.s32.totalorder %s25, 0
      %p125 = por %p123, %p124
      %s127 = sadd.s32 %s126, 1
      %p130 = scmp.eq.s32.totalorder %s19, 3
      %p131 = scmp.ne.s32.totalorder %s126, %s128
      %p132 = scmp.eq.s32.totalorder %s19, 0
      %p133 = por %p131, %p132
      %p134 = scmp.ne.s32.totalorder %s126, %s128
      %p135 = scmp.eq.s32.totalorder %s24, 3
      %p136 = por %p134, %p135
      %p137 = scmp.ne.s32.totalorder %s128, %s129
      %p138 = scmp.eq.s32.totalorder %s24, 0
      %p139 = por %p137, %p138
      %p140 = scmp.ne.s32.totalorder %s128, %s129
      %p141 = scmp.eq.s32.totalorder %s25, 3
      %p142 = por %p140, %p141
      %p144 = scmp.ne.s32.totalorder %s129, %s143
      %p145 = scmp.eq.s32.totalorder %s25, 0
      %p146 = por %p144, %p145
      %s147 = ssub.s32 %s19, %s26
      %p148 = scmp.eq.s32.totalorder %s147, 0
      %s150 = sadd.s32 %s149, 1
      %s151 = scalar_select %p148, %s149, %s150
      %p154 = pneg %p148
      %p155 = scmp.eq.s32.totalorder %s19, 3
      %p156 = por %p154, %p155
      %p157 = scmp.ne.s32.totalorder %s149, %s152
      %p158 = scmp.eq.s32.totalorder %s19, 0
      %p159 = por %p157, %p158
      %p160 = scmp.ne.s32.totalorder %s149, %s152
      %p161 = scmp.eq.s32.totalorder %s24, 3
      %p162 = por %p160, %p161
      %p163 = scmp.ne.s32.totalorder %s152, %s153
      %p164 = scmp.eq.s32.totalorder %s24, 0
      %p165 = por %p163, %p164
      %p166 = scmp.ne.s32.totalorder %s152, %s153
      %p167 = scmp.eq.s32.totalorder %s25, 3
      %p168 = por %p166, %p167
      %p170 = scmp.ne.s32.totalorder %s153, %s169
      %p171 = scmp.eq.s32.totalorder %s25, 0
      %p172 = por %p170, %p171
      %p173 = scmp.le.s32.totalorder 1, %s19
      %p174 = scmp.lt.s32.totalorder %s19, 5
      %p175 = pnand %p173, %p174
      %p176 = pneg %p175
      // Predicated region
      $region9: #{tpu_custom_call.1} parent=5 // pred_check
        _
      $region10: #{tpu_custom_call.1} parent=5 // pred_check_branch
        %178 = sbr.rel (%p175) target = $region12
      $region11: #{tpu_custom_call.1} parent=5 // pred_region
        %s179 = ssub.s32 %s19, 1
        // Predicated region
        $region13: #{tpu_custom_call.1} parent=11 // pred_check
          %p180 = pneg %p118
        $region14: #{tpu_custom_call.1} parent=11 // pred_check_branch
          %182 = sbr.rel (%p180) target = $region16
        $region15: #{tpu_custom_call.1} parent=11 // pred_region
          %s184 = ssub.s32 1024, 1024
          %185 = vsyncadd [#allocation9], %s184
          %s186 = sshll.u32 [#allocation8], 4
          %s187 = int_to_ptr.vmem [resolvable:$true] %s186
          %192 = dma.hbm_to_vmem [thread:$0]  %s3, 1024, %s187, [#allocation9], 64, 64, 4
        $region16: #{tpu_custom_call.1} parent=11 // pred_fallthru
          _
        // Predicated region
        $region17: #{tpu_custom_call.1} parent=11 // pred_check
          %p193 = pneg %p139
        $region18: #{tpu_custom_call.1} parent=11 // pred_check_branch
          %195 = sbr.rel (%p193) target = $region20
        $region19: #{tpu_custom_call.1} parent=11 // pred_region
          _
        $region20: #{tpu_custom_call.1} parent=11 // pred_fallthru
          _
      $region12: #{tpu_custom_call.1} parent=5 // pred_fallthru
        _
      %p196 = scmp.lt.s32.totalorder %s19, 4
      // Predicated region
      $region21: #{tpu_custom_call.1} parent=5 // pred_check
        %p197 = pneg %p196
      $region22: #{tpu_custom_call.1} parent=5 // pred_check_branch
        %199 = sbr.rel (%p197) target = $region24
      $region23: #{tpu_custom_call.1} parent=5 // pred_region
        // Predicated region
        $region25: #{tpu_custom_call.1} parent=23 // pred_check
          %p200 = pneg %p39
        $region26: #{tpu_custom_call.1} parent=23 // pred_check_branch
          %202 = sbr.rel (%p200) target = $region28
        $region27: #{tpu_custom_call.1} parent=23 // pred_region
          %s203 = sand.u32 %s29, 1
          %s204 = scalar_lea.sflag [#allocation4], %s203
          %s205 = sand.u32 %s29, 1
          %s206 = smul.addr %s205, 32
          %s207 = scalar_lea.vmem [#allocation3], %s206
          %s208 = smul.u32 8, %s19
          %s209 = ssub.s32 25, %s208
          %p210 = scmp.lt.s32.totalorder %s209, 8
          %s211 = scalar_select %p210, %s209, 8
          %s212 = smul.u32 64, %s211
          %s214 = ssub.s32 512, %s212
          %215 = vsyncadd %s204, %s214
          %p216 = scmp.ne.s32.totalorder 0, %s212
          %s217 = smul.addr %s208, 64
          %s218 = scalar_lea.hbm %s0, %s217
          %s219 = smul.u32 4, %s211
          %s220 = sshll.u32 %s207, 4
          %s221 = int_to_ptr.vmem [resolvable:$true] %s220
          %s222 = sshll.u32 %s219, 4
          %226 = dma.hbm_to_vmem [thread:$0]  (%p216), %s218, %s222, %s221, %s204, 64, 64, 4
        $region28: #{tpu_custom_call.1} parent=23 // pred_fallthru
          _
        // Predicated region
        $region29: #{tpu_custom_call.1} parent=23 // pred_check
          %p227 = pneg %p65
        $region30: #{tpu_custom_call.1} parent=23 // pred_check_branch
          %229 = sbr.rel (%p227) target = $region32
        $region31: #{tpu_custom_call.1} parent=23 // pred_region
          %s230 = sand.u32 %s19, 1
          %s231 = scalar_lea.sflag [#allocation6], %s230
          %s232 = sand.u32 %s55, 1
          %s233 = smul.addr %s232, 32
          %s234 = scalar_lea.vmem [#allocation5], %s233
          %s235 = smul.u32 8, %s19
          %s236 = ssub.s32 25, %s235
          %p237 = scmp.lt.s32.totalorder %s236, 8
          %s238 = scalar_select %p237, %s236, 8
          %s239 = smul.u32 64, %s238
          %s241 = ssub.s32 512, %s239
          %242 = vsyncadd %s231, %s241
          %p243 = scmp.ne.s32.totalorder 0, %s239
          %s244 = smul.addr %s235, 64
          %s245 = scalar_lea.hbm %s1, %s244
          %s246 = smul.u32 4, %s238
          %s247 = sshll.u32 %s234, 4
          %s248 = int_to_ptr.vmem [resolvable:$true] %s247
          %s249 = sshll.u32 %s246, 4
          %253 = dma.hbm_to_vmem [thread:$0]  (%p243), %s245, %s249, %s248, %s231, 64, 64, 4
        $region32: #{tpu_custom_call.1} parent=23 // pred_fallthru
          _
        // Predicated region
        $region33: #{tpu_custom_call.1} parent=23 // pred_check
          %p254 = pneg %p91
        $region34: #{tpu_custom_call.1} parent=23 // pred_check_branch
          %256 = sbr.rel (%p254) target = $region36
        $region35: #{tpu_custom_call.1} parent=23 // pred_region
          %s257 = sand.u32 %s19, 1
          %s258 = scalar_lea.sflag [#allocation6], %s257
          %s259 = sand.u32 %s81, 1
          %s260 = smul.addr %s259, 32
          %s261 = scalar_lea.vmem [#allocation7], %s260
          %s262 = smul.u32 8, %s19
          %s263 = ssub.s32 25, %s262
          %p264 = scmp.lt.s32.totalorder %s263, 8
          %s265 = scalar_select %p264, %s263, 8
          %s266 = smul.u32 64, %s265
          %s268 = ssub.s32 512, %s266
          %269 = vsyncadd %s258, %s268
          %p270 = scmp.ne.s32.totalorder 0, %s266
          %s271 = smul.addr %s262, 64
          %s272 = scalar_lea.hbm %s2, %s271
          %s273 = smul.u32 4, %s265
          %s274 = sshll.u32 %s261, 4
          %s275 = int_to_ptr.vmem [resolvable:$true] %s274
          %s276 = sshll.u32 %s273, 4
          %280 = dma.hbm_to_vmem [thread:$0]  (%p270), %s272, %s276, %s275, %s258, 64, 64, 4
        $region36: #{tpu_custom_call.1} parent=23 // pred_fallthru
          _
      $region24: #{tpu_custom_call.1} parent=5 // pred_fallthru
        _
      %p281 = scmp.le.s32.totalorder 1, %s19
      %p282 = scmp.lt.s32.totalorder %s19, 5
      %p283 = pnand %p281, %p282
      %p284 = pneg %p283
      // Predicated region
      $region37: #{tpu_custom_call.1} parent=5 // pred_check
        _
      $region38: #{tpu_custom_call.1} parent=5 // pred_check_branch
        %286 = sbr.rel (%p283) target = $region40
      $region39: #{tpu_custom_call.1} parent=5 // pred_region
        %s287 = ssub.s32 %s19, 1
        %s288 = sand.u32 %s32, 1
        %s289 = scalar_lea.sflag [#allocation4], %s288
        %s290 = sand.u32 %s32, 1
        %s291 = smul.addr %s290, 32
        %s292 = scalar_lea.vmem [#allocation3], %s291
        // Predicated region
        $region41: #{tpu_custom_call.1} parent=39 // pred_check
          %p293 = pneg %p45
        $region42: #{tpu_custom_call.1} parent=39 // pred_check_branch
          %295 = sbr.rel (%p293) target = $region44
        $region43: #{tpu_custom_call.1} parent=39 // pred_region
          %296 = dma.done %s289, 512
        $region44: #{tpu_custom_call.1} parent=39 // pred_fallthru
          _
        %s297 = sand.u32 %s24, 1
        %s298 = scalar_lea.sflag [#allocation6], %s297
        %s299 = sand.u32 %s58, 1
        %s300 = smul.addr %s299, 32
        %s301 = scalar_lea.vmem [#allocation5], %s300
        // Predicated region
        $region45: #{tpu_custom_call.1} parent=39 // pred_check
          %p302 = pneg %p71
        $region46: #{tpu_custom_call.1} parent=39 // pred_check_branch
          %304 = sbr.rel (%p302) target = $region48
        $region47: #{tpu_custom_call.1} parent=39 // pred_region
          %305 = dma.done %s298, 512
        $region48: #{tpu_custom_call.1} parent=39 // pred_fallthru
          _
        %s306 = sand.u32 %s24, 1
        %s307 = scalar_lea.sflag [#allocation6], %s306
        %s308 = sand.u32 %s84, 1
        %s309 = smul.addr %s308, 32
        %s310 = scalar_lea.vmem [#allocation7], %s309
        // Predicated region
        $region49: #{tpu_custom_call.1} parent=39 // pred_check
          %p311 = pneg %p97
        $region50: #{tpu_custom_call.1} parent=39 // pred_check_branch
          %313 = sbr.rel (%p311) target = $region52
        $region51: #{tpu_custom_call.1} parent=39 // pred_region
          %314 = dma.done %s307, 512
        $region52: #{tpu_custom_call.1} parent=39 // pred_fallthru
          _
        // Predicated region
        $region53: #{tpu_custom_call.1} parent=39 // pred_check
          %p315 = pneg %p118
        $region54: #{tpu_custom_call.1} parent=39 // pred_check_branch
          %317 = sbr.rel (%p315) target = $region56
        $region55: #{tpu_custom_call.1} parent=39 // pred_region
          %318 = dma.done [#allocation9], 1024
        $region56: #{tpu_custom_call.1} parent=39 // pred_fallthru
          _
        %s319 = sand.u32 %s32, 1
        %s320 = scalar_lea.sflag [#allocation4], %s319
        %s321 = sand.u32 %s32, 1
        %s322 = smul.addr %s321, 32
        %s323 = scalar_lea.vmem [#allocation3], %s322
        %p324 = pneg %p45
        %p325 = pneg %p42
        %s326 = sand.u32 %s24, 1
        %s327 = scalar_lea.sflag [#allocation6], %s326
        %s328 = sand.u32 %s58, 1
        %s329 = smul.addr %s328, 32
        %s330 = scalar_lea.vmem [#allocation5], %s329
        %p331 = pneg %p71
        %p332 = pneg %p68
        %s333 = sand.u32 %s24, 1
        %s334 = scalar_lea.sflag [#allocation6], %s333
        %s335 = sand.u32 %s84, 1
        %s336 = smul.addr %s335, 32
        %s337 = scalar_lea.vmem [#allocation7], %s336
        %p338 = pneg %p97
        %p339 = pneg %p94
        %p340 = pneg %p118
        %p341 = pneg %p115
        %p342 = pneg %p139
        %p343 = pneg %p136
        %p344 = pneg %p165
        %p345 = pneg %p162
        %s346 = sand.u32 %s152, 1
        %s347 = sand.u32 %s152, 1
        %s348 = smul.addr %s347, 64
        %s349 = scalar_lea.vmem [#allocation10], %s348
        %s350 = smul.u32 8, %s24
        %s351 = ssub.s32 25, %s350
        %p352 = scmp.lt.s32.totalorder %s351, 8
        %s353 = scalar_select %p352, %s351, 8
        %s354 = smul.u32 64, %s353
        %s355 = smul.u32 8, %s24
        %s356 = ssub.s32 25, %s355
        %p357 = scmp.lt.s32.totalorder %s356, 8
        %s358 = scalar_select %p357, %s356, 8
        %s359 = smul.u32 64, %s358
        %s360 = smul.u32 8, %s24
        %s361 = ssub.s32 25, %s360
        %p362 = scmp.lt.s32.totalorder %s361, 8
        %s363 = scalar_select %p362, %s361, 8
        %s364 = smul.u32 64, %s363
        %s365 = smul.u32 8, %s24
        %s366 = ssub.s32 25, %s365
        %p367 = scmp.lt.s32.totalorder %s366, 8
        %s368 = scalar_select %p367, %s366, 8
        %s369 = smul.u32 128, %s368
        %v371 = vld [vmem:[%s292] sm:$0xf]
        %v372 = vld [vmem:[%s292 + $0x4] sm:$0xf]
        %v373 = vld [vmem:[%s292 + $0x8] sm:$0xf]
        %v374 = vld [vmem:[%s292 + $0xc] sm:$0xf]
        %v375 = vld [vmem:[%s292 + $0x10] sm:$0xf]
        %v376 = vld [vmem:[%s292 + $0x14] sm:$0xf]
        %v377 = vld [vmem:[%s292 + $0x18] sm:$0xf]
        %v378 = vld [vmem:[%s292 + $0x1c] sm:$0xf]
        %v379 = vld [vmem:[#allocation8] sm:$0xf]
        %v380 = vld [vmem:[#allocation8 + $0x4] sm:$0xf]
        %v381 = vld [vmem:[#allocation8 + $0x8] sm:$0xf]
        %v382 = vld [vmem:[#allocation8 + $0xc] sm:$0xf]
        %v383 = vld [vmem:[#allocation8 + $0x10] sm:$0xf]
        %v384 = vld [vmem:[#allocation8 + $0x14] sm:$0xf]
        %v385 = vld [vmem:[#allocation8 + $0x18] sm:$0xf]
        %v386 = vld [vmem:[#allocation8 + $0x1c] sm:$0xf]
        %v387 = vld [vmem:[#allocation8 + $0x20] sm:$0xf]
        %v388 = vld [vmem:[#allocation8 + $0x24] sm:$0xf]
        %v389 = vld [vmem:[#allocation8 + $0x28] sm:$0xf]
        %v390 = vld [vmem:[#allocation8 + $0x2c] sm:$0xf]
        %v391 = vld [vmem:[#allocation8 + $0x30] sm:$0xf]
        %v392 = vld [vmem:[#allocation8 + $0x34] sm:$0xf]
        %v393 = vld [vmem:[#allocation8 + $0x38] sm:$0xf]
        %v394 = vld [vmem:[#allocation8 + $0x3c] sm:$0xf]
        %v403 = vunpack.c.l.b16 %v371
        %v404 = vunpack.c.l.b16 %v372
        %v405 = vunpack.c.l.b16 %v373
        %v406 = vunpack.c.l.b16 %v374
        %v407 = vunpack.c.l.b16 %v375
        %v408 = vunpack.c.l.b16 %v376
        %v409 = vunpack.c.l.b16 %v377
        %v410 = vunpack.c.l.b16 %v378
        %v411 = vpack.c.b16 %v404, %v403
        %v412 = vpack.c.b16 %v406, %v405
        %v413 = vpack.c.b16 %v408, %v407
        %v414 = vpack.c.b16 %v410, %v409
        %v435 = vunpack.c.l.b16 %v379
        %v436 = vunpack.c.l.b16 %v380
        %v437 = vunpack.c.l.b16 %v381
        %v438 = vunpack.c.l.b16 %v382
        %v439 = vunpack.c.l.b16 %v383
        %v440 = vunpack.c.l.b16 %v384
        %v441 = vunpack.c.l.b16 %v385
        %v442 = vunpack.c.l.b16 %v386
        %v443 = vunpack.c.l.b16 %v387
        %v444 = vunpack.c.l.b16 %v388
        %v445 = vunpack.c.l.b16 %v389
        %v446 = vunpack.c.l.b16 %v390
        %v447 = vunpack.c.l.b16 %v391
        %v448 = vunpack.c.l.b16 %v392
        %v449 = vunpack.c.l.b16 %v393
        %v450 = vunpack.c.l.b16 %v394
        %v451 = vpack.c.b16 %v436, %v435
        %v452 = vpack.c.b16 %v438, %v437
        %v453 = vpack.c.b16 %v440, %v439
        %v454 = vpack.c.b16 %v442, %v441
        %v455 = vpack.c.b16 %v444, %v443
        %v456 = vpack.c.b16 %v446, %v445
        %v457 = vpack.c.b16 %v448, %v447
        %v458 = vpack.c.b16 %v450, %v449
        %467 = vmatprep.subr.bf16.mxu0 0
        %468 = vmatpush1.bf16.msra.mxu0 %v458
        %469 = vmatprep.subr.bf16.mxu0 0
        %470 = vmatpush1.bf16.msra.mxu0 %v457
        %471 = vmatprep.subr.bf16.mxu0 0
        %472 = vmatpush1.bf16.msra.mxu0 %v456
        %473 = vmatprep.subr.bf16.mxu0 0
        %474 = vmatpush1.bf16.msra.mxu0 %v455
        %475 = vmatprep.subr.bf16.mxu0 0
        %476 = vmatpush1.bf16.msra.mxu0 %v454
        %477 = vmatprep.subr.bf16.mxu0 0
        %478 = vmatpush1.bf16.msra.mxu0 %v453
        %479 = vmatprep.subr.bf16.mxu0 0
        %480 = vmatpush1.bf16.msra.mxu0 %v452
        %481 = vmatprep.subr.bf16.mxu0 0
        %482 = vmatpush1.bf16.msra.mxu0 %v451
        %483 = vmatprep.subr.bf16.mxu0 0
        %484 = vmatpush2.bf16.msra.mxu0 0
        %485 = vmatprep.subr.bf16.mxu0 0
        %486 = vmatpush2.bf16.msra.mxu0 0
        %487 = vmatprep.subr.bf16.mxu0 0
        %488 = vmatpush2.bf16.msra.mxu0 0
        %489 = vmatprep.subr.bf16.mxu0 0
        %490 = vmatpush2.bf16.msra.mxu0 0
        %491 = vmatprep.subr.bf16.mxu0 0
        %492 = vmatpush2.bf16.msra.mxu0 0
        %493 = vmatprep.subr.bf16.mxu0 0
        %494 = vmatpush2.bf16.msra.mxu0 0
        %495 = vmatprep.subr.bf16.mxu0 0
        %496 = vmatpush2.bf16.msra.mxu0 0
        %497 = vmatprep.subr.bf16.mxu0 0
        %498 = vmatpush2.bf16.msra.mxu0 0
        %499 = vmatprep.mubr.bf16.mxu0 0
        %500 = vmatmul.mubr.bf16.gmra.mxu0 %v411
        %v501 = vpop.f32.mrf.mxu0
        %v502 = vadd.f32 0.0, %v501
        %v503 = vpop.f32.mrf.mxu0
        %v504 = vpop.f32.mrf.mxu0
        %v505 = vadd.f32 0.0, %v504
        %v506 = vpop.f32.mrf.mxu0
        %507 = vmatprep.mubr.bf16.mxu0 0
        %508 = vmatmul.mubr.bf16.gmra.mxu0 %v412
        %v509 = vpop.f32.mrf.mxu0
        %v510 = vadd.f32 0.0, %v509
        %v511 = vpop.f32.mrf.mxu0
        %v512 = vpop.f32.mrf.mxu0
        %v513 = vadd.f32 0.0, %v512
        %v514 = vpop.f32.mrf.mxu0
        %515 = vmatprep.mubr.bf16.mxu0 0
        %516 = vmatmul.mubr.bf16.gmra.mxu0 %v413
        %v517 = vpop.f32.mrf.mxu0
        %v518 = vadd.f32 0.0, %v517
        %v519 = vpop.f32.mrf.mxu0
        %v520 = vpop.f32.mrf.mxu0
        %v521 = vadd.f32 0.0, %v520
        %v522 = vpop.f32.mrf.mxu0
        %523 = vmatprep.mubr.bf16.mxu0 0
        %524 = vmatmul.mubr.bf16.gmra.mxu0 %v414
        %v525 = vpop.f32.mrf.mxu0
        %v526 = vadd.f32 0.0, %v525
        %v527 = vpop.f32.mrf.mxu0
        %v528 = vpop.f32.mrf.mxu0
        %v529 = vadd.f32 0.0, %v528
        %v530 = vpop.f32.mrf.mxu0
        %531 = vdwg.mxu0
        %s532 = sld [smem:[#allocation2]]
        %v533 = vld [vmem:[%s301] sm:$0xf]
        %v534 = vld [vmem:[%s301 + $0x4] sm:$0xf]
        %v535 = vld [vmem:[%s301 + $0x8] sm:$0xf]
        %v536 = vld [vmem:[%s301 + $0xc] sm:$0xf]
        %v537 = vld [vmem:[%s301 + $0x10] sm:$0xf]
        %v538 = vld [vmem:[%s301 + $0x14] sm:$0xf]
        %v539 = vld [vmem:[%s301 + $0x18] sm:$0xf]
        %v540 = vld [vmem:[%s301 + $0x1c] sm:$0xf]
        %v541 = vunpack.c.l.bf16 %v533
        %v542 = vunpack.c.l.bf16 %v534
        %v543 = vunpack.c.l.bf16 %v535
        %v544 = vunpack.c.l.bf16 %v536
        %v545 = vunpack.c.l.bf16 %v537
        %v546 = vunpack.c.l.bf16 %v538
        %v547 = vunpack.c.l.bf16 %v539
        %v548 = vunpack.c.l.bf16 %v540
        %v549 = vld [vmem:[%s310] sm:$0xf]
        %v550 = vld [vmem:[%s310 + $0x4] sm:$0xf]
        %v551 = vld [vmem:[%s310 + $0x8] sm:$0xf]
        %v552 = vld [vmem:[%s310 + $0xc] sm:$0xf]
        %v553 = vld [vmem:[%s310 + $0x10] sm:$0xf]
        %v554 = vld [vmem:[%s310 + $0x14] sm:$0xf]
        %v555 = vld [vmem:[%s310 + $0x18] sm:$0xf]
        %v556 = vld [vmem:[%s310 + $0x1c] sm:$0xf]
        %v557 = vunpack.c.l.bf16 %v549
        %v558 = vunpack.c.l.bf16 %v550
        %v559 = vunpack.c.l.bf16 %v551
        %v560 = vunpack.c.l.bf16 %v552
        %v561 = vunpack.c.l.bf16 %v553
        %v562 = vunpack.c.l.bf16 %v554
        %v563 = vunpack.c.l.bf16 %v555
        %v564 = vunpack.c.l.bf16 %v556
        %v565 = vmul.f32 %v541, %v502
        %v566 = vmul.f32 %v542, %v505
        %v567 = vmul.f32 %v543, %v510
        %v568 = vmul.f32 %v544, %v513
        %v569 = vmul.f32 %v545, %v518
        %v570 = vmul.f32 %v546, %v521
        %v571 = vmul.f32 %v547, %v526
        %v572 = vmul.f32 %v548, %v529
        %573 = vadd.xlane.f32.xlu0 %v565
        %v574 = vpop.xlane.xlu0 %573
        %575 = vadd.xlane.f32.xlu0 %v566
        %v576 = vpop.xlane.xlu0 %575
        %577 = vadd.xlane.f32.xlu0 %v567
        %v578 = vpop.xlane.xlu0 %577
        %579 = vadd.xlane.f32.xlu0 %v568
        %v580 = vpop.xlane.xlu0 %579
        %581 = vadd.xlane.f32.xlu0 %v569
        %v582 = vpop.xlane.xlu0 %581
        %583 = vadd.xlane.f32.xlu0 %v570
        %v584 = vpop.xlane.xlu0 %583
        %585 = vadd.xlane.f32.xlu0 %v571
        %v586 = vpop.xlane.xlu0 %585
        %587 = vadd.xlane.f32.xlu0 %v572
        %v588 = vpop.xlane.xlu0 %587
        %v589 = vstv %s532
        %v590 = vadd.f32 %v574, %v589
        %v591 = vadd.f32 %v576, %v589
        %v592 = vadd.f32 %v578, %v589
        %v593 = vadd.f32 %v580, %v589
        %v594 = vadd.f32 %v582, %v589
        %v595 = vadd.f32 %v584, %v589
        %v596 = vadd.f32 %v586, %v589
        %v597 = vadd.f32 %v588, %v589
        %vm598 = vcmask 7168
        %599 = vst.msk [vmem:[%s349] sm:$0xff] %vm598, %v590
        %600 = vst.msk [vmem:[%s349 + $0x8] sm:$0xff] %vm598, %v591
        %601 = vst.msk [vmem:[%s349 + $0x10] sm:$0xff] %vm598, %v592
        %602 = vst.msk [vmem:[%s349 + $0x18] sm:$0xff] %vm598, %v593
        %603 = vst.msk [vmem:[%s349 + $0x20] sm:$0xff] %vm598, %v594
        %604 = vst.msk [vmem:[%s349 + $0x28] sm:$0xff] %vm598, %v595
        %605 = vst.msk [vmem:[%s349 + $0x30] sm:$0xff] %vm598, %v596
        %606 = vst.msk [vmem:[%s349 + $0x38] sm:$0xff] %vm598, %v597
        %v607 = vmul.f32 %v557, %v502
        %v608 = vmul.f32 %v558, %v505
        %v609 = vmul.f32 %v559, %v510
        %v610 = vmul.f32 %v560, %v513
        %v611 = vmul.f32 %v561, %v518
        %v612 = vmul.f32 %v562, %v521
        %v613 = vmul.f32 %v563, %v526
        %v614 = vmul.f32 %v564, %v529
        %615 = vadd.xlane.f32.xlu0 %v607
        %v616 = vpop.xlane.xlu0 %615
        %617 = vadd.xlane.f32.xlu0 %v608
        %v618 = vpop.xlane.xlu0 %617
        %619 = vadd.xlane.f32.xlu0 %v609
        %v620 = vpop.xlane.xlu0 %619
        %621 = vadd.xlane.f32.xlu0 %v610
        %v622 = vpop.xlane.xlu0 %621
        %623 = vadd.xlane.f32.xlu0 %v611
        %v624 = vpop.xlane.xlu0 %623
        %625 = vadd.xlane.f32.xlu0 %v612
        %v626 = vpop.xlane.xlu0 %625
        %627 = vadd.xlane.f32.xlu0 %v613
        %v628 = vpop.xlane.xlu0 %627
        %629 = vadd.xlane.f32.xlu0 %v614
        %v630 = vpop.xlane.xlu0 %629
        %v631 = vadd.f32 %v616, %v589
        %v632 = vadd.f32 %v618, %v589
        %v633 = vadd.f32 %v620, %v589
        %v634 = vadd.f32 %v622, %v589
        %v635 = vadd.f32 %v624, %v589
        %v636 = vadd.f32 %v626, %v589
        %v637 = vadd.f32 %v628, %v589
        %v638 = vadd.f32 %v630, %v589
        %vm639 = vcmask 15368
        %640 = vst.msk [vmem:[%s349] sm:$0xff] %vm639, %v631
        %641 = vst.msk [vmem:[%s349 + $0x8] sm:$0xff] %vm639, %v632
        %642 = vst.msk [vmem:[%s349 + $0x10] sm:$0xff] %vm639, %v633
        %643 = vst.msk [vmem:[%s349 + $0x18] sm:$0xff] %vm639, %v634
        %644 = vst.msk [vmem:[%s349 + $0x20] sm:$0xff] %vm639, %v635
        %645 = vst.msk [vmem:[%s349 + $0x28] sm:$0xff] %vm639, %v636
        %646 = vst.msk [vmem:[%s349 + $0x30] sm:$0xff] %vm639, %v637
        %647 = vst.msk [vmem:[%s349 + $0x38] sm:$0xff] %vm639, %v638
        %s648 = sand.u32 %s152, 1
        %s649 = sand.u32 %s152, 1
        %s650 = smul.addr %s649, 64
        %s651 = scalar_lea.vmem [#allocation10], %s650
        // Predicated region
        $region57: #{tpu_custom_call.1} parent=39 // pred_check
          %p652 = pneg %p162
        $region58: #{tpu_custom_call.1} parent=39 // pred_check_branch
          %654 = sbr.rel (%p652) target = $region60
        $region59: #{tpu_custom_call.1} parent=39 // pred_region
          %s655 = smul.u32 8, %s24
          %s656 = ssub.s32 25, %s655
          %p657 = scmp.lt.s32.totalorder %s656, 8
          %s658 = scalar_select %p657, %s656, 8
          %s659 = smul.u32 128, %s658
          %p660 = scmp.ne.s32.totalorder 0, %s659
          %s661 = smul.addr %s655, 8
          %s662 = scalar_lea.vmem %s5, %s661
          // Predicated region
          $region61: #{tpu_custom_call.1} parent=59 // pred_check
            %p663 = pneg %p660
          $region62: #{tpu_custom_call.1} parent=59 // pred_check_branch
            %665 = sbr.rel (%p663) target = $region64
          $region63: #{tpu_custom_call.1} parent=59 // pred_region
            // Predicated region
            $region65: #{tpu_custom_call.1} parent=63 // pred_check
              _
            $region66: #{tpu_custom_call.1} parent=63 // pred_check_branch
              %667 = sbr.rel (0) target = $region68
            $region67: #{tpu_custom_call.1} parent=63 // pred_region
              // Predicated region
              $region87: #{tpu_custom_call.1} parent=67 // pred_check
                _
              $region88: #{tpu_custom_call.1} parent=67 // pred_check_branch
                %731 = sbr.rel (0) target = $region90
              $region89: #{tpu_custom_call.1} parent=67 // pred_region
                %s732 = sshrl.u32 %s658, 3
                // While loop
                $region91: #{tpu_custom_call.1} parent=89 // loop_pre_header
                  _
                $region92: #{tpu_custom_call.1} parent=89 // loop_header
                  %s734 = sphi 0, %s736
                  %p735 = scmp.ge.s32.totalorder %s734, %s732
                  %s739 = sphi 0, %s760
                  %s740 = sphi %s651, %s763
                  %s741 = sphi %s662, %s764
                $region93: #{tpu_custom_call.1} parent=89 // loop_header_branch
                  %738 = sbr.rel (%p735) target = $region97
                $region94: #{tpu_custom_call.1} parent=89 // loop_body
                  %v742 = vld [vmem:[%s740] sm:$0xff]
                  %743 = vst [vmem:[%s741] sm:$0xff] %v742
                  %v744 = vld [vmem:[%s740 + $0x8] sm:$0xff]
                  %745 = vst [vmem:[%s741 + $0x8] sm:$0xff] %v744
                  %v746 = vld [vmem:[%s740 + $0x10] sm:$0xff]
                  %747 = vst [vmem:[%s741 + $0x10] sm:$0xff] %v746
                  %v748 = vld [vmem:[%s740 + $0x18] sm:$0xff]
                  %749 = vst [vmem:[%s741 + $0x18] sm:$0xff] %v748
                  %v750 = vld [vmem:[%s740 + $0x20] sm:$0xff]
                  %751 = vst [vmem:[%s741 + $0x20] sm:$0xff] %v750
                  %v752 = vld [vmem:[%s740 + $0x28] sm:$0xff]
                  %753 = vst [vmem:[%s741 + $0x28] sm:$0xff] %v752
                  %v754 = vld [vmem:[%s740 + $0x30] sm:$0xff]
                  %755 = vst [vmem:[%s741 + $0x30] sm:$0xff] %v754
                  %v756 = vld [vmem:[%s740 + $0x38] sm:$0xff]
                  %757 = vst [vmem:[%s741 + $0x38] sm:$0xff] %v756
                  %s758 = sadd.s32 1, %s739
                  %p759 = scmp.ge.s32.totalorder %s758, %s732
                  %s760 = scalar_select %p759, 0, %s758
                  %s761 = smul.u32 %s760, 64
                  %s762 = smul.u32 %s760, 64
                  %s763 = scalar_lea.vmem %s651, %s761 [#allocation10]
                  %s764 = scalar_lea.vmem %s662, %s762
                $region95: #{tpu_custom_call.1} parent=89 // loop_footer
                  %s736 = sadd.s32 %s734, 1
                $region96: #{tpu_custom_call.1} parent=89 // loop_footer_branch
                  %733 = sbr.rel target = $region92
                $region97: #{tpu_custom_call.1} parent=89 // loop_exit
                  _
                %s765 = sshrl.u32 %s658, 3
                %s766 = sand.u32 %s658, 7
                %s767 = smul.u32 %s765, 8
                %s768 = smul.u32 8, %s767
                %s769 = scalar_lea.vmem %s651, %s768 [#allocation10]
                %s770 = smul.u32 8, %s767
                %s771 = scalar_lea.vmem %s662, %s770
                // While loop
                $region98: #{tpu_custom_call.1} parent=89 // loop_pre_header
                  _
                $region99: #{tpu_custom_call.1} parent=89 // loop_header
                  %s773 = sphi 0, %s775
                  %p774 = scmp.ge.s32.totalorder %s773, %s766
                  %s778 = sphi 0, %s785
                  %s779 = sphi %s769, %s788
                  %s780 = sphi %s771, %s789
                $region100: #{tpu_custom_call.1} parent=89 // loop_header_branch
                  %777 = sbr.rel (%p774) target = $region104
                $region101: #{tpu_custom_call.1} parent=89 // loop_body
                  %v781 = vld [vmem:[%s779] sm:$0xff]
                  %782 = vst [vmem:[%s780] sm:$0xff] %v781
                  %s783 = sadd.s32 1, %s778
                  %p784 = scmp.ge.s32.totalorder %s783, %s766
                  %s785 = scalar_select %p784, 0, %s783
                  %s786 = smul.u32 %s785, 8
                  %s787 = smul.u32 %s785, 8
                  %s788 = scalar_lea.vmem %s769, %s786 [#allocation10]
                  %s789 = scalar_lea.vmem %s771, %s787
                $region102: #{tpu_custom_call.1} parent=89 // loop_footer
                  %s775 = sadd.s32 %s773, 1
                $region103: #{tpu_custom_call.1} parent=89 // loop_footer_branch
                  %772 = sbr.rel target = $region99
                $region104: #{tpu_custom_call.1} parent=89 // loop_exit
                  _
              $region90: #{tpu_custom_call.1} parent=67 // pred_fallthru
                _
              // Predicated region
              $region105: #{tpu_custom_call.1} parent=67 // pred_check
                _
              $region106: #{tpu_custom_call.1} parent=67 // pred_check_branch
                %791 = sbr.rel target = $region108
              $region107: #{tpu_custom_call.1} parent=67 // pred_region
                _
              $region108: #{tpu_custom_call.1} parent=67 // pred_fallthru
                _
            $region68: #{tpu_custom_call.1} parent=63 // pred_fallthru
              _
            // Predicated region
            $region69: #{tpu_custom_call.1} parent=63 // pred_check
              _
            $region70: #{tpu_custom_call.1} parent=63 // pred_check_branch
              %669 = sbr.rel target = $region72
            $region71: #{tpu_custom_call.1} parent=63 // pred_region
              %s671 = ssub.s32 256, 1
              %s672 = sshrl.u32 %s658, 3
              // While loop
              $region73: #{tpu_custom_call.1} parent=71 // loop_pre_header
                _
              $region74: #{tpu_custom_call.1} parent=71 // loop_header
                %s674 = sphi 0, %s676
                %p675 = scmp.ge.s32.totalorder %s674, %s672
                %s679 = sphi 0, %s700
                %s680 = sphi %s651, %s703
                %s681 = sphi %s662, %s704
              $region75: #{tpu_custom_call.1} parent=71 // loop_header_branch
                %678 = sbr.rel (%p675) target = $region79
              $region76: #{tpu_custom_call.1} parent=71 // loop_body
                %v682 = vld [vmem:[%s680] sm:%s671]
                %683 = vst [vmem:[%s681] sm:%s671] %v682
                %v684 = vld [vmem:[%s680 + $0x8] sm:%s671]
                %685 = vst [vmem:[%s681 + $0x8] sm:%s671] %v684
                %v686 = vld [vmem:[%s680 + $0x10] sm:%s671]
                %687 = vst [vmem:[%s681 + $0x10] sm:%s671] %v686
                %v688 = vld [vmem:[%s680 + $0x18] sm:%s671]
                %689 = vst [vmem:[%s681 + $0x18] sm:%s671] %v688
                %v690 = vld [vmem:[%s680 + $0x20] sm:%s671]
                %691 = vst [vmem:[%s681 + $0x20] sm:%s671] %v690
                %v692 = vld [vmem:[%s680 + $0x28] sm:%s671]
                %693 = vst [vmem:[%s681 + $0x28] sm:%s671] %v692
                %v694 = vld [vmem:[%s680 + $0x30] sm:%s671]
                %695 = vst [vmem:[%s681 + $0x30] sm:%s671] %v694
                %v696 = vld [vmem:[%s680 + $0x38] sm:%s671]
                %697 = vst [vmem:[%s681 + $0x38] sm:%s671] %v696
                %s698 = sadd.s32 1, %s679
                %p699 = scmp.ge.s32.totalorder %s698, %s672
                %s700 = scalar_select %p699, 0, %s698
                %s701 = smul.u32 %s700, 64
                %s702 = smul.u32 %s700, 64
                %s703 = scalar_lea.vmem %s651, %s701 [#allocation10]
                %s704 = scalar_lea.vmem %s662, %s702
              $region77: #{tpu_custom_call.1} parent=71 // loop_footer
                %s676 = sadd.s32 %s674, 1
              $region78: #{tpu_custom_call.1} parent=71 // loop_footer_branch
                %673 = sbr.rel target = $region74
              $region79: #{tpu_custom_call.1} parent=71 // loop_exit
                _
              %s705 = sshrl.u32 %s658, 3
              %s706 = sand.u32 %s658, 7
              %s707 = smul.u32 %s705, 8
              %s708 = smul.u32 8, %s707
              %s709 = scalar_lea.vmem %s651, %s708 [#allocation10]
              %s710 = smul.u32 8, %s707
              %s711 = scalar_lea.vmem %s662, %s710
              // While loop
              $region80: #{tpu_custom_call.1} parent=71 // loop_pre_header
                _
              $region81: #{tpu_custom_call.1} parent=71 // loop_header
                %s713 = sphi 0, %s715
                %p714 = scmp.ge.s32.totalorder %s713, %s706
                %s718 = sphi 0, %s725
                %s719 = sphi %s709, %s728
                %s720 = sphi %s711, %s729
              $region82: #{tpu_custom_call.1} parent=71 // loop_header_branch
                %717 = sbr.rel (%p714) target = $region86
              $region83: #{tpu_custom_call.1} parent=71 // loop_body
                %v721 = vld [vmem:[%s719] sm:%s671]
                %722 = vst [vmem:[%s720] sm:%s671] %v721
                %s723 = sadd.s32 1, %s718
                %p724 = scmp.ge.s32.totalorder %s723, %s706
                %s725 = scalar_select %p724, 0, %s723
                %s726 = smul.u32 %s725, 8
                %s727 = smul.u32 %s725, 8
                %s728 = scalar_lea.vmem %s709, %s726 [#allocation10]
                %s729 = scalar_lea.vmem %s711, %s727
              $region84: #{tpu_custom_call.1} parent=71 // loop_footer
                %s715 = sadd.s32 %s713, 1
              $region85: #{tpu_custom_call.1} parent=71 // loop_footer_branch
                %712 = sbr.rel target = $region81
              $region86: #{tpu_custom_call.1} parent=71 // loop_exit
                _
            $region72: #{tpu_custom_call.1} parent=63 // pred_fallthru
              _
          $region64: #{tpu_custom_call.1} parent=59 // pred_fallthru
            _
          %792 = vnop
        $region60: #{tpu_custom_call.1} parent=39 // pred_fallthru
          _
      $region40: #{tpu_custom_call.1} parent=5 // pred_fallthru
        _
      %p793 = scmp.le.s32.totalorder 2, %s19
      // Predicated region
      $region109: #{tpu_custom_call.1} parent=5 // pred_check
        %p794 = pneg %p793
      $region110: #{tpu_custom_call.1} parent=5 // pred_check_branch
        %796 = sbr.rel (%p794) target = $region112
      $region111: #{tpu_custom_call.1} parent=5 // pred_region
        %s797 = ssub.s32 %s19, 2
        // Predicated region
        $region113: #{tpu_custom_call.1} parent=111 // pred_check
          %p798 = pneg %p168
        $region114: #{tpu_custom_call.1} parent=111 // pred_check_branch
          %800 = sbr.rel (%p798) target = $region116
        $region115: #{tpu_custom_call.1} parent=111 // pred_region
          %s801 = sand.u32 %s153, 1
          %s802 = sand.u32 %s153, 1
          %s803 = smul.addr %s802, 64
          %s804 = scalar_lea.vmem [#allocation10], %s803
        $region116: #{tpu_custom_call.1} parent=111 // pred_fallthru
          _
      $region112: #{tpu_custom_call.1} parent=5 // pred_fallthru
        _
    $region6: #{tpu_custom_call.1} parent=1 // loop_footer
      %s23 = sadd.s32 1, %s19
    $region7: #{tpu_custom_call.1} parent=1 // loop_footer_branch
      %18 = sbr.rel target = $region3
    $region8: #{tpu_custom_call.1} parent=1 // loop_exit
      _
    %805 = vsyncpa [#allocation4], 1
    %s806 = scalar_lea.sflag [#allocation4], 1
    %807 = vsyncpa %s806, 1
    %808 = vsyncpa [#allocation6], 1
    %s809 = scalar_lea.sflag [#allocation6], 1
    %810 = vsyncpa %s809, 1
    %811 = vsyncpa [#allocation9], 1

</llo_original>
